<compile_context>
chip_gen: v5e
topology: v5e:2x2
jax: 0.10.0
libtpu: 0.0.40
codegen_flags: <defaults>
</compile_context>

<pallas_src>
import math
from typing import NamedTuple

import jax
import jax.numpy as jnp
from jax.experimental import pallas as pl
from jax.experimental.pallas import tpu as pltpu

LN_EPS = 1e-5  # PyTorch nn.LayerNorm default


def _round_up(x, m):
    return (x + m - 1) // m * m


def _default_tile_cap():
    """Per-generation lane cap: 4 MiB x-blocks on v5e (16 MiB scoped VMEM),
    8 MiB x-blocks on v6e / v7x (32 MiB scoped VMEM)."""
    try:
        kind = jax.devices()[0].device_kind.lower()
    except Exception:
        return 32768
    return 32768 if "v5" in kind else 65536


def _choose_tile_n(n128, cap):
    """Largest multiple of 128 that divides n128 and is <= cap (no pad waste).
    Falls back to `cap` (bounded padding) only if the best exact divisor is
    too small to amortize the per-grid-step overhead."""
    cap = max(128, min(cap, n128))
    cap -= cap % 128
    m = n128 // 128
    best = 1
    d = 1
    while d * d <= m:
        if m % d == 0:
            for cand in (d, m // d):
                if 128 * cand <= cap and cand > best:
                    best = cand
        d += 1
    tile = 128 * best
    if tile * 4 < cap:  # exact divisor too small -> accept bounded padding
        tile = cap
    return tile


class ItemTable(NamedTuple):
    x_t: jax.Array        # (E, n_pad) transposed, padded item embeddings
    bias_row: jax.Array   # (1, n_pad) padded raw item bias
    n: int                # true item count
    tile_n: int           # lanes per grid step (multiple of 128)
    n_pad: int            # padded item count (multiple of tile_n)


def prepare_item_table(item_emb, item_bias, tile_cap=None, table_dtype=jnp.float32):
    """One-time prep (static across user queries): transpose + pad the item table
    so the hot path does no extra HBM passes.  Use table_dtype=jnp.bfloat16 to
    halve item-table bandwidth (kernel upcasts to f32)."""
    n, e = item_emb.shape
    if tile_cap is None:
        tile_cap = _default_tile_cap()
    n128 = _round_up(n, 128)
    tile_n = _choose_tile_n(n128, tile_cap)
    assert tile_n % 128 == 0, "tile_n must be a multiple of 128"
    n_pad = _round_up(n128, tile_n)
    x_t = jnp.pad(item_emb.T.astype(table_dtype), ((0, 0), (0, n_pad - n)))
    bias_row = jnp.pad(item_bias.reshape(1, -1).astype(jnp.float32),
                       ((0, 0), (0, n_pad - n)))
    return ItemTable(x_t=x_t, bias_row=bias_row, n=n, tile_n=tile_n, n_pad=n_pad)


def _fold_user_params(params):
    """Hoist all grid-invariant user-side math out of the kernel:
         w_c = center(item_bn_g * LN(user_emb))   (mean-centered, so in-kernel
                                                    sum(w_c*x) == sum(w*(x-mu)))
         c   = sum(item_bn_b * LN(user_emb)) + bias   (scalar, added from SMEM)"""
    u = params["user_emb"].astype(jnp.float32).reshape(1, -1)
    mu = jnp.mean(u, axis=-1, keepdims=True)
    uc = u - mu
    var = jnp.mean(uc * uc, axis=-1, keepdims=True)
    u_n = uc * jax.lax.rsqrt(var + LN_EPS) * params["user_bn_g"] + params["user_bn_b"]
    w = (u_n * params["item_bn_g"]).reshape(-1)                       # (E,)
    w_c = (w - jnp.mean(w)).reshape(-1, 1).astype(jnp.float32)        # (E, 1)
    c = (jnp.sum(u_n * params["item_bn_b"]) + params["bias"][0]).reshape(1)
    return w_c, c.astype(jnp.float32)


def _prediction_kernel(c_ref, w_ref, x_ref, bias_ref, out_ref):
    """Moment-form item LayerNorm + dot with the folded, mean-centered user weight.

    Layout: E on sublanes, items on lanes (lane-dense output).
      c_ref    : SMEM (1,)  folded scalar  sum(item_bn_b*LN(u)) + bias
      w_ref    : (E, 1)     mean-centered folded weight
      x_ref    : (E, T)     transposed item-embedding tile (f32 or bf16)
      bias_ref : (1, T)     raw item bias tile
      out_ref  : (1, T)     predictions for this tile
    """
    x = x_ref[...].astype(jnp.float32)                      # (E, T)
    w = w_ref[...]                                           # (E, 1)
    inv_e = 1.0 / x.shape[0]
    s1 = jnp.sum(x, axis=0, keepdims=True)                   # (1, T)
    s2 = jnp.sum(x * x, axis=0, keepdims=True)                # (1, T)
    sw = jnp.sum(x * w, axis=0, keepdims=True)                # (1, T) == sum w*(x-mu)
    mu = s1 * inv_e
    var = s2 * inv_e - mu * mu                                # biased var (PyTorch LN)
    inv = jax.lax.rsqrt(var + LN_EPS)                         # EUP
    out_ref[...] = (sw * inv + bias_ref[...] + c_ref[0]).astype(out_ref.dtype)


def prediction_forward(table: ItemTable, params):
    """Per-query hot path: fold user params (tiny), run the HBM-bound item scan."""
    e = table.x_t.shape[0]
    tile_n = table.tile_n
    w_c, c = _fold_user_params(params)
    grid = (table.n_pad // tile_n,)
    item_bytes = table.x_t.dtype.itemsize

    out = pl.pallas_call(
        _prediction_kernel,
        out_shape=jax.ShapeDtypeStruct((1, table.n_pad), jnp.float32),
        grid=grid,
        in_specs=[
            pl.BlockSpec(memory_space=pltpu.MemorySpace.SMEM),   # c: folded scalar
            pl.BlockSpec((e, 1), lambda i: (0, 0)),              # w_c: grid-invariant
            pl.BlockSpec((e, tile_n), lambda i: (0, i)),         # item-emb tile (transposed)
            pl.BlockSpec((1, tile_n), lambda i: (0, i)),         # raw item bias tile
        ],
        out_specs=pl.BlockSpec((1, tile_n), lambda i: (0, i)),
        compiler_params=pltpu.CompilerParams(
            dimension_semantics=("parallel",)),                  # shard N across TCs (v7x)
        cost_estimate=pl.CostEstimate(
            flops=6 * table.n_pad * e,
            transcendentals=table.n_pad,
            bytes_accessed=item_bytes * e * table.n_pad + 4 * (2 * table.n_pad + e + 1)),
    )(c, w_c, table.x_t, table.bias_row)

    return out[0, :table.n]


def init_params(key, emb_size):
    # Faithful to the module's __init__:
    #   user_emb ~ N(0, 0.05), bias = 0, LayerNorm gamma=1 / beta=0.
    user_emb = 0.05 * jax.random.normal(key, (1, emb_size), dtype=jnp.float32)
    return {
        "user_emb": user_emb,
        "bias": jnp.zeros((1,), jnp.float32),
        "user_bn_g": jnp.ones((1, emb_size), jnp.float32),
        "user_bn_b": jnp.zeros((1, emb_size), jnp.float32),
        "item_bn_g": jnp.ones((1, emb_size), jnp.float32),
        "item_bn_b": jnp.zeros((1, emb_size), jnp.float32),
    }


def reference_forward(item_emb, item_bias, params):
    def ln(x, g, b):
        mu = jnp.mean(x, axis=-1, keepdims=True)
        var = jnp.mean((x - mu) ** 2, axis=-1, keepdims=True)
        return (x - mu) / jnp.sqrt(var + LN_EPS) * g + b

    u = ln(params["user_emb"], params["user_bn_g"], params["user_bn_b"])
    x = ln(item_emb, params["item_bn_g"], params["item_bn_b"])
    return jnp.sum(u * x, axis=1) + params["bias"] + item_bias.reshape(-1)


# TODO(synk): loss / train_model (BCEWithLogits + AdamW loop) are training-side
# and not part of the forward kernel; not translated.

if __name__ == "__main__":
    key = jax.random.PRNGKey(0)
    k1, k2, k3, k4 = jax.random.split(key, 4)

    N, E = 8, 32  # small demo shapes: 8 items, emb_size=32
    params = init_params(k1, E)
    # Perturb the LayerNorm affines / bias so the folded-weight path is exercised
    # with non-trivial values (module init has gamma=1, beta=0, bias=0).
    g = jax.random.split(k4, 5)
    params["user_bn_g"] = 1.0 + 0.1 * jax.random.normal(g[0], (1, E), jnp.float32)
    params["user_bn_b"] = 0.1 * jax.random.normal(g[1], (1, E), jnp.float32)
    params["item_bn_g"] = 1.0 + 0.1 * jax.random.normal(g[2], (1, E), jnp.float32)
    params["item_bn_b"] = 0.1 * jax.random.normal(g[3], (1, E), jnp.float32)
    params["bias"] = 0.1 * jax.random.normal(g[4], (1,), jnp.float32)

    item_emb = jax.random.normal(k2, (N, E), dtype=jnp.float32)
    item_bias = jax.random.normal(k3, (N,), dtype=jnp.float32)

    # One-time (hoisted) item-table prep, then the per-query forward.
    table = prepare_item_table(item_emb, item_bias)
    preds = prediction_forward(table, params)
    preds = jax.block_until_ready(preds)

    ref = reference_forward(item_emb, item_bias, params)
    assert preds.shape == (N,)
    assert jnp.allclose(preds, ref, atol=1e-4, rtol=1e-4), float(
        jnp.max(jnp.abs(preds - ref)))

    print("KERNEL_OK")
</pallas_src>

<mosaic_0001>
module attributes {stable_mosaic.version = 11 : i64} {
  func.func @_prediction_kernel(%arg0: i32, %arg1: memref<1xf32, #tpu.memory_space<smem>>, %arg2: memref<32x1xf32, #tpu.memory_space<vmem>>, %arg3: memref<32x128xf32, #tpu.memory_space<vmem>>, %arg4: memref<1x128xf32, #tpu.memory_space<vmem>>, %arg5: memref<1x128xf32, #tpu.memory_space<vmem>>) attributes {dimension_semantics = [#tpu.dimension_semantics<parallel>], iteration_bounds = array<i64: 1>, scalar_prefetch = 0 : i64, scratch_operands = 0 : i64, tpu.core_type = #tpu.core_type<tc>, window_params = [{transform_indices = @transform_0, window_bounds = array<i64: 1>}, {pipeline_mode = #tpu.pipeline_mode<synchronous>, transform_indices = @transform_1, window_bounds = array<i64: 32, 1>}, {transform_indices = @transform_2, window_bounds = array<i64: 32, 128>}, {transform_indices = @transform_3, window_bounds = array<i64: 1, 128>}, {transform_indices = @transform_4, window_bounds = array<i64: 1, 128>}]} {
    %c0 = arith.constant 0 : index
    %c0_0 = arith.constant 0 : index
    %0 = vector.load %arg3[%c0, %c0_0] : memref<32x128xf32, #tpu.memory_space<vmem>>, vector<32x128xf32>
    %c0_1 = arith.constant 0 : index
    %c0_2 = arith.constant 0 : index
    %1 = vector.load %arg2[%c0_1, %c0_2] : memref<32x1xf32, #tpu.memory_space<vmem>>, vector<32x1xf32>
    %cst = arith.constant dense<0.000000e+00> : vector<128xf32>
    %2 = vector.multi_reduction <add>, %0, %cst [0] : vector<32x128xf32> to vector<128xf32>
    %3 = vector.shape_cast %2 : vector<128xf32> to vector<1x128xf32>
    %4 = arith.mulf %0, %0 : vector<32x128xf32>
    %cst_3 = arith.constant dense<0.000000e+00> : vector<128xf32>
    %5 = vector.multi_reduction <add>, %4, %cst_3 [0] : vector<32x128xf32> to vector<128xf32>
    %6 = vector.shape_cast %5 : vector<128xf32> to vector<1x128xf32>
    %7 = vector.broadcast %1 : vector<32x1xf32> to vector<32x128xf32>
    %8 = arith.mulf %0, %7 : vector<32x128xf32>
    %cst_4 = arith.constant dense<0.000000e+00> : vector<128xf32>
    %9 = vector.multi_reduction <add>, %8, %cst_4 [0] : vector<32x128xf32> to vector<128xf32>
    %10 = vector.shape_cast %9 : vector<128xf32> to vector<1x128xf32>
    %cst_5 = arith.constant 3.125000e-02 : f32
    %11 = vector.broadcast %cst_5 : f32 to vector<1x128xf32>
    %12 = arith.mulf %3, %11 : vector<1x128xf32>
    %cst_6 = arith.constant 3.125000e-02 : f32
    %13 = vector.broadcast %cst_6 : f32 to vector<1x128xf32>
    %14 = arith.mulf %6, %13 : vector<1x128xf32>
    %15 = arith.mulf %12, %12 : vector<1x128xf32>
    %16 = arith.subf %14, %15 : vector<1x128xf32>
    %cst_7 = arith.constant 9.99999974E-6 : f32
    %17 = vector.broadcast %cst_7 : f32 to vector<1x128xf32>
    %18 = arith.addf %16, %17 : vector<1x128xf32>
    %19 = math.rsqrt %18 : vector<1x128xf32>
    %20 = arith.mulf %10, %19 : vector<1x128xf32>
    %c0_8 = arith.constant 0 : index
    %c0_9 = arith.constant 0 : index
    %21 = vector.load %arg4[%c0_8, %c0_9] : memref<1x128xf32, #tpu.memory_space<vmem>>, vector<1x128xf32>
    %22 = arith.addf %20, %21 : vector<1x128xf32>
    %c0_10 = arith.constant 0 : index
    %23 = memref.load %arg1[%c0_10] : memref<1xf32, #tpu.memory_space<smem>>
    %24 = vector.broadcast %23 : f32 to vector<1x128xf32>
    %25 = arith.addf %22, %24 : vector<1x128xf32>
    %c0_11 = arith.constant 0 : index
    %c0_12 = arith.constant 0 : index
    %26 = vector.load %arg5[%c0_11, %c0_12] : memref<1x128xf32, #tpu.memory_space<vmem>>, vector<1x128xf32>
    tpu.vector_store %arg5[%c0_11, %c0_12], %25 {strides = array<i32>} : memref<1x128xf32, #tpu.memory_space<vmem>>, vector<1x128xf32>,
    return
  }
  func.func @transform_0(%arg0: i32) -> i32 {
    %c0_i32 = arith.constant 0 : i32
    %c0_i32_0 = arith.constant 0 : i32
    return %c0_i32 : i32
  }
  func.func @transform_1(%arg0: i32) -> (i32, i32) {
    %c0_i32 = arith.constant 0 : i32
    %c0_i32_0 = arith.constant 0 : i32
    %c0_i32_1 = arith.constant 0 : i32
    return %c0_i32, %c0_i32_0 : i32, i32
  }
  func.func @transform_2(%arg0: i32) -> (i32, i32) {
    %c0_i32 = arith.constant 0 : i32
    %c0_i32_0 = arith.constant 0 : i32
    return %c0_i32, %arg0 : i32, i32
  }
  func.func @transform_3(%arg0: i32) -> (i32, i32) {
    %c0_i32 = arith.constant 0 : i32
    %c0_i32_0 = arith.constant 0 : i32
    return %c0_i32, %arg0 : i32, i32
  }
  func.func @transform_4(%arg0: i32) -> (i32, i32) {
    %c0_i32 = arith.constant 0 : i32
    %c0_i32_0 = arith.constant 0 : i32
    return %c0_i32, %arg0 : i32, i32
  }
}

</mosaic_0001>

<llo_original>
// kernel: tpu_custom_call.1
$region0: #{tpu_custom_call.1}
  #allocation0 [shape = 'u32[]', space=smem, size = 0x4, offset = 0x4, fixed_abs, tag = 'smem constant byte address 0x4 - core index']
  #allocation1 [shape = 'u32[72,128]{1,0:T(1,128)}', space=vmem, size = 0x9000, scoped, tag = 'internal scratch']
  #allocation2 [shape = 'f32[1]{0:T(128)S(6)}', space=smem, size = 0x200, scoped, tag = 'scoped memory for tpu_custom_call.1']
  %s0 = inlined_call_operand.<no memory space> [shape: f32[1], index: 0, kind: input, shape index: {}]
  %s1 = inlined_call_operand.vmem [shape: f32[32,1], index: 1, kind: input, shape index: {}]
  %s2 = inlined_call_operand.vmem [shape: f32[32,128], index: 2, kind: input, shape index: {}]
  %s3 = inlined_call_operand.vmem [shape: f32[1,128], index: 3, kind: input, shape index: {}]
  %s4 = inlined_call_operand.hbm [shape: f32[1,128], index: 4, kind: output, shape index: {}]
  %s5 = sld [smem:[#allocation0]]
  $region26: #{tpu_custom_call.1} parent=0
    _
  %s7 = ssub.s32 1, %s5
  %s8 = scalar_select 0, %s7, %s5
  %9 = sst [smem:[#allocation2]] %s0
  $region1: #{tpu_custom_call.1} parent=0
    #allocation3 [shape = 'u8[512]{0}', space=vmem, size = 0x400, scoped, tag = 'output window, operand 0, single buffered']
    #allocation4 [shape = 's32[1]{0}', space=sflag, size = 0x4, scoped, tag = 'scoped memory for tpu_custom_call.1']
    %10 = vsyncpa [#allocation4], 0
    // Predicated region
    $region2: #{tpu_custom_call.1} parent=1 // pred_check
      _
    $region3: #{tpu_custom_call.1} parent=1 // pred_check_branch
      %12 = sbr.rel (0) target = $region5
    $region4: #{tpu_custom_call.1} parent=1 // pred_region
      _
    $region5: #{tpu_custom_call.1} parent=1 // pred_fallthru
      _
    // Predicated region
    $region6: #{tpu_custom_call.1} parent=1 // pred_check
      _
    $region7: #{tpu_custom_call.1} parent=1 // pred_check_branch
      %14 = sbr.rel (0) target = $region9
    $region8: #{tpu_custom_call.1} parent=1 // pred_region
      _
    $region9: #{tpu_custom_call.1} parent=1 // pred_fallthru
      _
    // Predicated region
    $region10: #{tpu_custom_call.1} parent=1 // pred_check
      _
    $region11: #{tpu_custom_call.1} parent=1 // pred_check_branch
      %16 = sbr.rel (0) target = $region13
    $region12: #{tpu_custom_call.1} parent=1 // pred_region
      _
    $region13: #{tpu_custom_call.1} parent=1 // pred_fallthru
      _
    // Predicated region
    $region14: #{tpu_custom_call.1} parent=1 // pred_check
      _
    $region15: #{tpu_custom_call.1} parent=1 // pred_check_branch
      %18 = sbr.rel (0) target = $region17
    $region16: #{tpu_custom_call.1} parent=1 // pred_region
      _
    $region17: #{tpu_custom_call.1} parent=1 // pred_fallthru
      _
    %v19 = vld [vmem:[%s2] sm:$0xff]
    %v20 = vld [vmem:[%s2 + $0x8] sm:$0xff]
    %v21 = vld [vmem:[%s2 + $0x10] sm:$0xff]
    %v22 = vld [vmem:[%s2 + $0x18] sm:$0xff]
    %v23 = vld [vmem:[%s1] sm:$0xff]
    %v24 = vld [vmem:[%s1 + $0x8] sm:$0xff]
    %v25 = vld [vmem:[%s1 + $0x10] sm:$0xff]
    %v26 = vld [vmem:[%s1 + $0x18] sm:$0xff]
    %v27 = vadd.f32 %v19, %v20
    %v28 = vadd.f32 %v27, %v21
    %v29 = vadd.f32 %v28, %v22
    %v30 = vrot.slane %v29, 4
    %v31 = vadd.f32 %v29, %v30
    %v32 = vrot.slane %v31, 2
    %v33 = vadd.f32 %v31, %v32
    %v34 = vrot.slane %v33, 1
    %v35 = vadd.f32 %v33, %v34
    %v36 = vmul.f32 %v19, %v19
    %v37 = vmul.f32 %v20, %v20
    %v38 = vmul.f32 %v21, %v21
    %v39 = vmul.f32 %v22, %v22
    %v40 = vadd.f32 %v36, %v37
    %v41 = vadd.f32 %v40, %v38
    %v42 = vadd.f32 %v41, %v39
    %v43 = vrot.slane %v42, 4
    %v44 = vadd.f32 %v42, %v43
    %v45 = vrot.slane %v44, 2
    %v46 = vadd.f32 %v44, %v45
    %v47 = vrot.slane %v46, 1
    %v48 = vadd.f32 %v46, %v47
    %50 = vset.pattern.permute.xlu0 0
    %51 = vperm.xlu0 %50, %v23
    %v52 = vpop.permute.xlu0 %51
    %55 = vset.pattern.permute.xlu0 0
    %56 = vperm.xlu0 %55, %v24
    %v57 = vpop.permute.xlu0 %56
    %60 = vset.pattern.permute.xlu0 0
    %61 = vperm.xlu0 %60, %v25
    %v62 = vpop.permute.xlu0 %61
    %65 = vset.pattern.permute.xlu0 0
    %66 = vperm.xlu0 %65, %v26
    %v67 = vpop.permute.xlu0 %66
    %v69 = vmul.f32 %v19, %v52
    %v70 = vmul.f32 %v20, %v57
    %v71 = vmul.f32 %v21, %v62
    %v72 = vmul.f32 %v22, %v67
    %v73 = vadd.f32 %v69, %v70
    %v74 = vadd.f32 %v73, %v71
    %v75 = vadd.f32 %v74, %v72
    %v76 = vrot.slane %v75, 4
    %v77 = vadd.f32 %v75, %v76
    %v78 = vrot.slane %v77, 2
    %v79 = vadd.f32 %v77, %v78
    %v80 = vrot.slane %v79, 1
    %v81 = vadd.f32 %v79, %v80
    %v82 = vmul.f32 %v35, 0.03125
    %v83 = vmul.f32 %v48, 0.03125
    %v84 = vmul.f32 %v82, %v82
    %v85 = vsub.f32 %v83, %v84
    %v86 = vadd.f32 %v85, 1e-05
    %v87 = vrsqrt.pop %v86
    %v88 = vmul.f32 %v87, %v86
    %v89 = vmul.f32 %v88, %v87
    %v90 = vmul.f32 0.5, %v89
    %v91 = vsub.f32 1.5, %v90
    %v92 = vmul.f32 %v87, %v91
    %vm93 = vweird.f32 %v86
    %vm94 = vweird.f32 %v87
    %vm95 = vmor %vm93, %vm94
    %v96 = vsel %vm95, %v87, %v92
    %v97 = vmul.f32 %v81, %v96
    %v98 = vld [vmem:[%s3] sm:$0x1]
    %v99 = vadd.f32 %v97, %v98
    %s100 = sld [smem:[#allocation2]]
    %v101 = vstv %s100
    %v102 = vadd.f32 %v99, %v101
    %103 = vst [vmem:[#allocation3] sm:$0x1] %v102
    // Predicated region
    $region18: #{tpu_custom_call.1} parent=1 // pred_check
      _
    $region19: #{tpu_custom_call.1} parent=1 // pred_check_branch
      %105 = sbr.rel (0) target = $region21
    $region20: #{tpu_custom_call.1} parent=1 // pred_region
      %107 = vsyncadd [#allocation4], 0
      %s109 = sshll.u32 [#allocation3], 4
      %s110 = int_to_ptr.vmem [resolvable:$true] %s109
      %s111 = sshll.u32 %s4, 4
      %s112 = int_to_ptr.hbm [resolvable:$true] %s111
      %114 = dma.vmem_to_hbm [thread:$0]  %s110, 16, %s112, [#allocation4]
    $region21: #{tpu_custom_call.1} parent=1 // pred_fallthru
      _
    // Predicated region
    $region22: #{tpu_custom_call.1} parent=1 // pred_check
      _
    $region23: #{tpu_custom_call.1} parent=1 // pred_check_branch
      %116 = sbr.rel (0) target = $region25
    $region24: #{tpu_custom_call.1} parent=1 // pred_region
      %118 = dma.done [#allocation4], 16
    $region25: #{tpu_custom_call.1} parent=1 // pred_fallthru
      _
    %119 = vsyncpa [#allocation4], 1

</llo_original>
